<compile_context>
chip_gen: v6e
topology: v6e:2x2x1
jax: 0.10.0
libtpu: 0.0.40
codegen_flags: <defaults>
</compile_context>

<pallas_src>
import math
import functools
import numpy as np
import jax
import jax.numpy as jnp
from jax.experimental import pallas as pl
from jax.experimental.pallas import tpu as pltpu

# ---------------- module "parameters" / constants (deterministic init) ----------------
SOFTMAX_W = 1.0   # nn.Parameter(1.0) -- only printed in the reference forward, unused in math
SOFTMAX_B = 0.0   # nn.Parameter(0.0) -- only printed in the reference forward, unused in math
SOFTARGMAX_TEMPERATURE = 10.0     # SpatialSoftArgmax2d(temperature=10, normalized_coordinates=False)
THRESHOLD = 4.0                   # sweeney_2p_layer(threshold=4)
FX = 804.18848168
CX = 128.0
CY = 128.0
TEMP_EVAL = 0.1                   # eval-mode softmax temperature
EPSILON_2D = 2.0                  # combination validity threshold (pixels)

# eval-mode fixed angles (self.training == False): ax = pi/2, ay = 0
_AX, _AY = math.pi / 2.0, 0.0
_RX = np.array([[1, 0, 0],
                [0, math.cos(_AX), -math.sin(_AX)],
                [0, math.sin(_AX), math.cos(_AX)]], np.float32)
_RY = np.array([[math.cos(_AY), 0, math.sin(_AY)],
                [0, 1, 0],
                [-math.sin(_AY), 0, math.cos(_AY)]], np.float32)
_RXY = (_RY @ _RX).astype(np.float32)
_KINV = np.array([[1.0 / FX, 0.0, -CX / FX],
                  [0.0, 1.0 / FX, -CY / FX],
                  [0.0, 0.0, 1.0]], np.float32)


def _round_up(x, m):
    return (x + m - 1) // m * m


def _vmem_caps():
    """(physical VMEM bytes, per-input double-buffer budget)."""
    try:
        cap = int(pltpu.get_tpu_info().vmem_capacity_bytes)
    except Exception:
        cap = 64 << 20            # conservative (v7x-sized) fallback
    if cap >= (128 << 20):        # v5e / v6e: 128 MiB -> bigger row tiles
        return cap, 24 << 20
    return cap, 8 << 20           # v7x: 64 MiB -> conservative


# ---------------------------- kernel 1: spatial soft-argmax ----------------------------
def _soft_argmax_kernel(x_ref, o_ref, pos_ref, *, W):
    # pos scratch: columns 0 -> px, 1 -> py, 2 -> ones, 3.. -> 0.  Generated in-kernel
    # (no HBM traffic, no double-buffered VMEM residency), filled once on step 0.
    @pl.when(pl.program_id(0) == 0)
    def _():
        HW = pos_ref.shape[0]
        hw = jax.lax.broadcasted_iota(jnp.int32, (HW, 128), 0).astype(jnp.float32)
        lane = jax.lax.broadcasted_iota(jnp.int32, (HW, 128), 1)
        py = jnp.floor((hw + 0.5) * (1.0 / float(W)))     # +0.5 guards fp-rounding at multiples of W
        px = hw - py * float(W)
        pos = jnp.where(lane == 0, px,
              jnp.where(lane == 1, py,
              jnp.where(lane == 2, 1.0, 0.0)))
        pos_ref[...] = pos.astype(jnp.bfloat16)

    x = x_ref[...] * SOFTARGMAX_TEMPERATURE               # (bm, HW)
    m = jnp.max(x, axis=-1, keepdims=True)
    e = jnp.exp(x - m)
    # One bf16 MXU matmul replaces three cross-lane reductions (f32 accumulation).
    r = jnp.dot(e.astype(jnp.bfloat16), pos_ref[...],
                preferred_element_type=jnp.float32)        # (bm, 128)
    o_ref[...] = r / r[:, 2:3]   # exact division; cols 0/1 = expected x / y, lane-dense store


def spatial_soft_argmax2d_flat(heatmaps):
    """kornia-style SpatialSoftArgmax2d(temperature=10, normalized_coordinates=False).
    Returns (B*C, 2) expected [x, y] coordinates."""
    B, C, H, W = heatmaps.shape
    M, HW = B * C, H * W
    x2d = heatmaps.reshape(M, HW).astype(jnp.float32)

    cap, in_budget = _vmem_caps()
    # Row tile: largest multiple of 8 (cap 512) keeping the double-buffered input block
    # within the per-part budget.
    row_bytes = HW * 4
    bm = max(8, min(512, (in_budget // (2 * row_bytes)) // 8 * 8))
    bm = min(bm, _round_up(M, 8))
    M_pad = _round_up(M, bm)
    if M_pad != M:
        x2d = jnp.pad(x2d, ((0, M_pad - M), (0, 0)))

    pos_bytes = HW * 128 * 2                    # bf16 scratch
    out_bytes = bm * 128 * 4
    base_limit = (96 << 20) if cap >= (128 << 20) else (32 << 20)
    needed = 2 * bm * row_bytes + pos_bytes + 2 * out_bytes + (2 << 20)
    vmem_limit = int(min(max(base_limit, needed), int(cap * 0.75)))

    # TODO(synk): for extremely large H*W (>= ~32K on v7x) add an HW reduction grid axis
    # with online max / partial [sum(e*x), sum(e*y), sum(e)] accumulation instead of
    # keeping the whole (bm, HW) row and the (HW, 128) pos scratch resident.
    out = pl.pallas_call(
        functools.partial(_soft_argmax_kernel, W=W),
        out_shape=jax.ShapeDtypeStruct((M_pad, 128), jnp.float32),
        grid=(M_pad // bm,),
        in_specs=[pl.BlockSpec((bm, HW), lambda i: (i, 0))],
        out_specs=pl.BlockSpec((bm, 128), lambda i: (i, 0)),
        scratch_shapes=[pltpu.VMEM((HW, 128), jnp.bfloat16)],
        compiler_params=pltpu.CompilerParams(
            # "arbitrary": sequential on one core so the pos scratch filled at step 0
            # stays valid for every later step (scratch is per-core).
            dimension_semantics=("arbitrary",),
            vmem_limit_bytes=vmem_limit),
    )(x2d)
    return out[:M, :2]


# ---------------- kernel 2: 2-point pose solve + reprojection residuals ----------------
# Fused input  (16, CB): rows 0-2 p1, 3-5 p2, 6-8 b1, 9-11 b2, 12-15 zero padding.
# Fused output (16, CB): rows 0-8 R (row-major 3x3), 9-11 t, 12-13 (dp1, dp2),
#                        row 14 disc, row 15 dist (already /temperature).
def _two_point_pose_kernel(pcb_ref, lmn_ref, out_ref):
    pc = pcb_ref[...]                                   # (16, CB), combinations on lanes
    p1x, p1y, p1z = pc[0:1], pc[1:2], pc[2:3]
    p2x, p2y, p2z = pc[3:4], pc[4:5], pc[5:6]
    b1x, b1y, b1z = pc[6:7], pc[7:8], pc[8:9]
    b2x, b2y, b2z = pc[9:10], pc[10:11], pc[11:12]

    dxm, dym, dzm = p1x - p2x, p1y - p2y, p1z - p2z

    # ---- TwoPointPoseCore (axis fixed at (0,0,1)) ----
    m = dzm / b1z
    n = b2z / b1z
    ray_dp = b1x * b2x + b1y * b2y + b1z * b2z
    a = n * (n - 2.0 * ray_dp) + 1.0
    b = 2.0 * m * (n - ray_dp)
    d2 = dxm * dxm + dym * dym + dzm * dzm
    c = m * m - d2
    disc = b * b - 4.0 * a * c          # Delta-condition (disc < 0) is checked once host-side
    # Verbatim reproduction of the reference expression, INCLUDING its operator precedence:
    #   myroot = -b + sqrt(disc) / (2 * a)
    myroot = -b + jnp.sqrt(disc) / (2.0 * a)
    ray_distance = m + n * myroot
    # TODO(synk): the reference raises NotImplementedError on NaN/Inf myroot; that
    # data-dependent raise stays host-side glue and is not reproduced here.

    # ---- AddPoseSolution ----
    pis1x, pis1y, pis1z = ray_distance * b1x, ray_distance * b1y, ray_distance * b1z
    pis2x, pis2y = myroot * b2x, myroot * b2y
    idx_, idy_ = pis1x - pis2x, pis1y - pis2y

    inv_md = jax.lax.rsqrt(d2)
    nmx, nmy = dxm * inv_md, dym * inv_md
    # basis_vector_2 = (0,0,1) x nm = (-nmy, nmx, 0); basis_vector_1 = bv2 x (0,0,1) = (nmx, nmy, 0)
    dp1 = nmx * idx_ + nmy * idy_
    dp2 = -nmy * idx_ + nmx * idy_
    # cos/sin of angle = atan2(dp2, dp1) (angle itself recovered with arctan2 outside)
    inv_r = jax.lax.rsqrt(dp1 * dp1 + dp2 * dp2)
    co = dp1 * inv_r
    si = dp2 * inv_r

    tx = pis1x - (co * p1x - si * p1y)
    ty = pis1y - (si * p1x + co * p1y)
    tz = pis1z - p1z

    zeros = jnp.zeros_like(co)
    ones = jnp.ones_like(co)

    # Direct sublane-slice writes into the single fused output block.
    out_ref[0:1, :] = co
    out_ref[1:2, :] = -si
    out_ref[2:3, :] = zeros
    out_ref[3:4, :] = si
    out_ref[4:5, :] = co
    out_ref[5:6, :] = zeros
    out_ref[6:7, :] = zeros
    out_ref[7:8, :] = zeros
    out_ref[8:9, :] = ones
    out_ref[9:10, :] = tx
    out_ref[10:11, :] = ty
    out_ref[11:12, :] = tz
    out_ref[12:13, :] = dp1
    out_ref[13:14, :] = dp2
    out_ref[14:15, :] = disc

    # ---- reprojection residuals, chunked over landmark slabs of 8 sublanes ----
    n_slabs = lmn_ref.shape[0] // 8

    def slab(s, acc):
        base = pl.multiple_of(s * 8, 8)
        lmn = lmn_ref[pl.ds(base, 8), :]                 # (8, 8)
        X, Y, Z = lmn[:, 0:1], lmn[:, 1:2], lmn[:, 2:3]  # Rxy-rotated landmark XYZ
        gx, gy = lmn[:, 3:4], lmn[:, 4:5]                # soft-argmax landmark xy
        msk = lmn[:, 5:6]                                # landmark validity mask
        rx = co * X - si * Y + tx                        # (8, CB)
        ry = si * X + co * Y + ty
        rz = Z + tz
        u = (FX * rx + CX * rz) / rz                     # exact division (numerics)
        v = (FX * ry + CY * rz) / rz
        du, dv = u - gx, v - gy
        dn = jnp.sqrt(du * du + dv * dv)
        resid = THRESHOLD - dn
        resid = jnp.where(resid > 0.0, resid, 0.0)
        resid = jnp.where(msk > 0.0, resid, 0.0)         # mask invalid/padded landmarks
        return acc + jnp.sum(resid, axis=0, keepdims=True)

    dist = jax.lax.fori_loop(0, n_slabs, slab, jnp.zeros_like(co), unroll=True)
    out_ref[15:16, :] = dist * (1.0 / TEMP_EVAL)
    # TODO(synk): if the per-combination solve (not the reprojection) ever dominates,
    # repack the solve phase as (8, CB/8) sublane x lane for full VPU occupancy.


# ------------------------------ fused, jitted forward core ------------------------------
@jax.jit
def _forward_core(pred_heatmaps, target_landmarks):
    B, NL, H, W = pred_heatmaps.shape
    M_land = B * NL

    lm2d_all = spatial_soft_argmax2d_flat(pred_heatmaps)              # (M_land, 2) Pallas
    mask = target_landmarks[:, :, 0].reshape(M_land).astype(jnp.float32)
    lm3d_all = target_landmarks[:, :, 3:6].reshape(M_land, 3).astype(jnp.float32)

    # Per-landmark precompute (M rows), gathered per combination afterwards.
    rxy_t = jnp.asarray(_RXY.T)
    lm3_rxy = lm3d_all @ rxy_t                                        # (M, 3)
    kinv_t = jnp.asarray(_KINV.T)
    bear = jnp.concatenate([lm2d_all, jnp.ones((M_land, 1), jnp.float32)], axis=-1) @ kinv_t
    bear = bear / jnp.linalg.norm(bear, axis=-1, keepdims=True)       # (M, 3)

    # Static all-pairs combination table (same lexicographic order as torch.combinations).
    idx1, idx2 = np.triu_indices(M_land, k=1)
    idx1 = idx1.astype(np.int32)
    idx2 = idx2.astype(np.int32)
    C = int(idx1.shape[0])

    lm2_1, lm2_2 = lm2d_all[idx1], lm2d_all[idx2]
    d2d = jnp.sqrt(jnp.sum((lm2_1 - lm2_2) ** 2, axis=-1))
    valid = (mask[idx1] > 0.5) & (mask[idx2] > 0.5) & (d2d > EPSILON_2D)
    validf = valid.astype(jnp.float32)

    p3d_1, p3d_2 = lm3_rxy[idx1], lm3_rxy[idx2]                        # (C, 3)
    b1, b2 = bear[idx1], bear[idx2]                                    # (C, 3)

    # Lane-major combination blocking.  >= 2 grid steps once C > 128 so the "parallel"
    # axis can be sharded across v7x's two TensorCores.
    C128 = _round_up(C, 128)
    if C128 <= 128:
        CB = C128
    else:
        CB = min(512, max(128, (C128 // 2) // 128 * 128))
    C_pad = _round_up(C128, CB)

    pcomb = jnp.concatenate(
        [p3d_1.T, p3d_2.T, b1.T, b2.T, jnp.zeros((4, C), jnp.float32)], axis=0)  # (16, C)
    pcomb = jnp.pad(pcomb, ((0, 0), (0, C_pad - C)))

    N_pad = _round_up(M_land, 8)
    lmn = jnp.concatenate(
        [lm3_rxy, lm2d_all, mask.reshape(M_land, 1), jnp.zeros((M_land, 2), jnp.float32)],
        axis=-1)                                                       # (M_land, 8)
    lmn = jnp.pad(lmn, ((0, N_pad - M_land), (0, 0)))

    pose = pl.pallas_call(
        _two_point_pose_kernel,
        out_shape=jax.ShapeDtypeStruct((16, C_pad), jnp.float32),
        grid=(C_pad // CB,),
        in_specs=[
            pl.BlockSpec((16, CB), lambda i: (0, i)),
            pl.BlockSpec((N_pad, 8), lambda i: (0, 0)),
        ],
        out_specs=pl.BlockSpec((16, CB), lambda i: (0, i)),
        compiler_params=pltpu.CompilerParams(
            dimension_semantics=("parallel",),
            vmem_limit_bytes=32 * 1024 * 1024),
    )(pcomb, lmn)

    r9 = pose[0:9]            # (9, C_pad)
    t_all = pose[9:12]        # (3, C_pad)
    dp1, dp2 = pose[12], pose[13]
    disc = pose[14]
    dist = pose[15]

    validp = jnp.pad(validf, (0, C_pad - C))                           # (C_pad,)

    # softmax over valid combinations (tiny vector; stays inside the same XLA program)
    z = jnp.where(validp > 0, dist, -1e30)
    zmax = jnp.max(z)
    e = jnp.exp(z - zmax)
    w = e / jnp.sum(e)                                                 # exactly 0 on invalid lanes

    az = jnp.arctan2(dp2, dp1)                                         # (C_pad,)
    az_safe = jnp.where(validp > 0, az, 0.0)
    t_safe = jnp.where(validp[None, :] > 0, t_all, 0.0)
    az_pred_mean = jnp.sum(w * az_safe).reshape(1)                     # (1,)
    t_pred_mean = jnp.sum(w[None, :] * t_safe, axis=-1).reshape(1, 3)  # (1, 3)

    min_disc = jnp.min(jnp.where(validp > 0, disc, jnp.inf))
    n_valid = jnp.sum(validp)
    return r9, t_pred_mean, az_pred_mean, min_disc, n_valid, validp


# ----------------------------------- forward wrapper -----------------------------------
def sweeney_2p_forward(pred_heatmaps, target_landmarks, transformation_gt):
    """Eval-mode forward of sweeney_2p_layer (self.training == False).
    # TODO(synk): training-mode branch (scipy Rotation euler angles from transformation_gt,
    # GT-2D residuals, temperature=10), the softmax_w/softmax_b debug print, and the
    # NaN/Inf NotImplementedError raises are host-side glue and not implemented here.
    """
    del transformation_gt   # only consumed by the (unimplemented) training branch

    B, NL = pred_heatmaps.shape[0], pred_heatmaps.shape[1]
    if B * NL < 2:
        print("No enough inliers!")
        return []

    # Single device->host sync, only for the data-dependent early returns and the
    # dynamic-shape gather of valid combinations.
    r9, t_pred_mean, az_pred_mean, min_disc, n_valid, validp = jax.device_get(
        _forward_core(pred_heatmaps, target_landmarks))

    if float(n_valid) < 0.5:
        print("No enough inliers!")
        return []
    if float(min_disc) < 0.0:
        print("Not satisfying Delta-Condition!")
        return []

    vidx = np.nonzero(validp > 0.5)[0]
    Cv = int(vidx.shape[0])
    Rz_pred = jnp.asarray(r9[:, vidx].T.reshape(1, Cv, 3, 3))
    return Rz_pred, jnp.asarray(t_pred_mean), jnp.asarray(az_pred_mean)


# ---------------------------------------- demo -----------------------------------------
if __name__ == "__main__":
    key = jax.random.PRNGKey(0)
    k_hm, k_gt, k_noise = jax.random.split(key, 3)

    B, NL, H, W = 1, 8, 16, 16
    pred_heatmaps = 3.0 * jax.random.normal(k_hm, (B, NL, H, W), jnp.float32)

    # target_landmarks layout: [:, :, 0]=mask, [:, :, 1:3]=2D GT, [:, :, 3:]=3D model points
    mask = jnp.ones((B, NL, 1), jnp.float32)
    lm2d_gt = jax.random.uniform(k_gt, (B, NL, 2), jnp.float32, minval=2.0, maxval=14.0)
    ang = jnp.linspace(0.0, 2.0 * math.pi, NL, endpoint=False)
    lm3d = jnp.stack([0.8 * jnp.cos(ang),
                      1.5 + 0.05 * jnp.sin(3.0 * ang),
                      2.0 + 0.8 * jnp.sin(ang)], axis=-1)[None]
    lm3d = lm3d + 0.02 * jax.random.normal(k_noise, lm3d.shape, jnp.float32)
    target_landmarks = jnp.concatenate([mask, lm2d_gt, lm3d.astype(jnp.float32)], axis=-1)
    transformation_gt = jnp.eye(4, dtype=jnp.float32)[None]

    out = sweeney_2p_forward(pred_heatmaps, target_landmarks, transformation_gt)
    assert isinstance(out, tuple) and len(out) == 3
    Rz_pred, t_pred_mean, az_pred_mean = out
    jax.block_until_ready((Rz_pred, t_pred_mean, az_pred_mean))
    assert np.all(np.isfinite(np.asarray(Rz_pred)))
    assert np.all(np.isfinite(np.asarray(t_pred_mean)))
    assert np.all(np.isfinite(np.asarray(az_pred_mean)))
    print("KERNEL_OK")
</pallas_src>

<mosaic_0001>
module attributes {stable_mosaic.version = 11 : i64} {
  func.func @_soft_argmax_kernel(%arg0: i32, %arg1: memref<8x256xf32, #tpu.memory_space<vmem>>, %arg2: memref<8x128xf32, #tpu.memory_space<vmem>>, %arg3: memref<256x128xbf16, #tpu.memory_space<vmem>>) attributes {dimension_semantics = [#tpu.dimension_semantics<arbitrary>], iteration_bounds = array<i64: 1>, scalar_prefetch = 0 : i64, scratch_operands = 1 : i64, tpu.core_type = #tpu.core_type<tc>, window_params = [{transform_indices = @transform_0, window_bounds = array<i64: 8, 256>}, {transform_indices = @transform_1, window_bounds = array<i64: 8, 128>}]} {
    %c0_i32 = arith.constant 0 : i32
    %0 = arith.cmpi eq, %arg0, %c0_i32 : i32
    %1 = arith.extui %0 : i1 to i32
    %c0_i32_0 = arith.constant 0 : i32
    %2 = arith.cmpi ne, %1, %c0_i32_0 : i32
    scf.if %2 {
      %18 = tpu.iota {dimensions = array<i32: 0>} : vector<256x128xi32>
      %19 = arith.sitofp %18 : vector<256x128xi32> to vector<256x128xf32>
      %20 = tpu.iota {dimensions = array<i32: 1>} : vector<256x128xi32>
      %cst_8 = arith.constant 5.000000e-01 : f32
      %21 = vector.broadcast %cst_8 : f32 to vector<256x128xf32>
      %22 = arith.addf %19, %21 : vector<256x128xf32>
      %cst_9 = arith.constant 6.250000e-02 : f32
      %23 = vector.broadcast %cst_9 : f32 to vector<256x128xf32>
      %24 = arith.mulf %22, %23 : vector<256x128xf32>
      %25 = math.floor %24 : vector<256x128xf32>
      %cst_10 = arith.constant 1.600000e+01 : f32
      %26 = vector.broadcast %cst_10 : f32 to vector<256x128xf32>
      %27 = arith.mulf %25, %26 : vector<256x128xf32>
      %28 = arith.subf %19, %27 : vector<256x128xf32>
      %c0_i32_11 = arith.constant 0 : i32
      %29 = vector.broadcast %c0_i32_11 : i32 to vector<256x128xi32>
      %30 = arith.cmpi eq, %20, %29 : vector<256x128xi32>
      %c1_i32 = arith.constant 1 : i32
      %31 = vector.broadcast %c1_i32 : i32 to vector<256x128xi32>
      %32 = arith.cmpi eq, %20, %31 : vector<256x128xi32>
      %c2_i32 = arith.constant 2 : i32
      %33 = vector.broadcast %c2_i32 : i32 to vector<256x128xi32>
      %34 = arith.cmpi eq, %20, %33 : vector<256x128xi32>
      %cst_12 = arith.constant 1.000000e+00 : f32
      %cst_13 = arith.constant 0.000000e+00 : f32
      %35 = vector.broadcast %cst_12 : f32 to vector<256x128xf32>
      %36 = vector.broadcast %cst_13 : f32 to vector<256x128xf32>
      %37 = arith.select %34, %35, %36 : vector<256x128xi1>, vector<256x128xf32>
      %38 = arith.select %32, %25, %37 : vector<256x128xi1>, vector<256x128xf32>
      %39 = arith.select %30, %28, %38 : vector<256x128xi1>, vector<256x128xf32>
      %40 = arith.truncf %39 : vector<256x128xf32> to vector<256x128xbf16>
      %c0_14 = arith.constant 0 : index
      %c0_15 = arith.constant 0 : index
      %41 = vector.load %arg3[%c0_14, %c0_15] : memref<256x128xbf16, #tpu.memory_space<vmem>>, vector<256x128xbf16>
      tpu.vector_store %arg3[%c0_14, %c0_15], %40 {strides = array<i32>} : memref<256x128xbf16, #tpu.memory_space<vmem>>, vector<256x128xbf16>,
    } else {
    }
    %c0 = arith.constant 0 : index
    %c0_1 = arith.constant 0 : index
    %3 = vector.load %arg1[%c0, %c0_1] : memref<8x256xf32, #tpu.memory_space<vmem>>, vector<8x256xf32>
    %cst = arith.constant 1.000000e+01 : f32
    %4 = vector.broadcast %cst : f32 to vector<8x256xf32>
    %5 = arith.mulf %3, %4 : vector<8x256xf32>
    %cst_2 = arith.constant dense<0xFF800000> : vector<8xf32>
    %6 = vector.multi_reduction <maximumf>, %5, %cst_2 [1] : vector<8x256xf32> to vector<8xf32>
    %7 = vector.shape_cast %6 : vector<8xf32> to vector<8x1xf32>
    %8 = vector.broadcast %7 : vector<8x1xf32> to vector<8x256xf32>
    %9 = arith.subf %5, %8 : vector<8x256xf32>
    %10 = math.exp %9 : vector<8x256xf32>
    %11 = arith.truncf %10 : vector<8x256xf32> to vector<8x256xbf16>
    %c0_3 = arith.constant 0 : index
    %c0_4 = arith.constant 0 : index
    %12 = vector.load %arg3[%c0_3, %c0_4] : memref<256x128xbf16, #tpu.memory_space<vmem>>, vector<256x128xbf16>
    %cst_5 = arith.constant dense<0.000000e+00> : vector<8x128xf32>
    %13 = tpu.matmul %11, %12, %cst_5 {dimension_numbers = #tpu.dot_dimension_numbers<[1], [0], [0], [1], [0, 0, 1, 1], [], []>} : vector<8x256xbf16>, vector<256x128xbf16>, vector<8x128xf32> -> vector<8x128xf32>
    %14 = vector.extract_strided_slice %13 {offsets = [0, 2], sizes = [8, 1], strides = [1, 1]} : vector<8x128xf32> to vector<8x1xf32>
    %15 = vector.broadcast %14 : vector<8x1xf32> to vector<8x128xf32>
    %16 = arith.divf %13, %15 : vector<8x128xf32>
    %c0_6 = arith.constant 0 : index
    %c0_7 = arith.constant 0 : index
    %17 = vector.load %arg2[%c0_6, %c0_7] : memref<8x128xf32, #tpu.memory_space<vmem>>, vector<8x128xf32>
    tpu.vector_store %arg2[%c0_6, %c0_7], %16 {strides = array<i32>} : memref<8x128xf32, #tpu.memory_space<vmem>>, vector<8x128xf32>,
    return
  }
  func.func @transform_0(%arg0: i32) -> (i32, i32) {
    %c0_i32 = arith.constant 0 : i32
    %c0_i32_0 = arith.constant 0 : i32
    return %arg0, %c0_i32 : i32, i32
  }
  func.func @transform_1(%arg0: i32) -> (i32, i32) {
    %c0_i32 = arith.constant 0 : i32
    %c0_i32_0 = arith.constant 0 : i32
    return %arg0, %c0_i32 : i32, i32
  }
}

module attributes {stable_mosaic.version = 11 : i64} {
  func.func @_two_point_pose_kernel(%arg0: i32, %arg1: memref<16x128xf32, #tpu.memory_space<vmem>>, %arg2: memref<8x8xf32, #tpu.memory_space<vmem>>, %arg3: memref<16x128xf32, #tpu.memory_space<vmem>>) attributes {dimension_semantics = [#tpu.dimension_semantics<parallel>], iteration_bounds = array<i64: 1>, scalar_prefetch = 0 : i64, scratch_operands = 0 : i64, tpu.core_type = #tpu.core_type<tc>, window_params = [{transform_indices = @transform_0, window_bounds = array<i64: 16, 128>}, {pipeline_mode = #tpu.pipeline_mode<synchronous>, transform_indices = @transform_1, window_bounds = array<i64: 8, 8>}, {transform_indices = @transform_2, window_bounds = array<i64: 16, 128>}]} {
    %c0 = arith.constant 0 : index
    %c0_0 = arith.constant 0 : index
    %0 = vector.load %arg1[%c0, %c0_0] : memref<16x128xf32, #tpu.memory_space<vmem>>, vector<16x128xf32>
    %1 = vector.extract_strided_slice %0 {offsets = [0, 0], sizes = [1, 128], strides = [1, 1]} : vector<16x128xf32> to vector<1x128xf32>
    %2 = vector.extract_strided_slice %0 {offsets = [1, 0], sizes = [1, 128], strides = [1, 1]} : vector<16x128xf32> to vector<1x128xf32>
    %3 = vector.extract_strided_slice %0 {offsets = [2, 0], sizes = [1, 128], strides = [1, 1]} : vector<16x128xf32> to vector<1x128xf32>
    %4 = vector.extract_strided_slice %0 {offsets = [3, 0], sizes = [1, 128], strides = [1, 1]} : vector<16x128xf32> to vector<1x128xf32>
    %5 = vector.extract_strided_slice %0 {offsets = [4, 0], sizes = [1, 128], strides = [1, 1]} : vector<16x128xf32> to vector<1x128xf32>
    %6 = vector.extract_strided_slice %0 {offsets = [5, 0], sizes = [1, 128], strides = [1, 1]} : vector<16x128xf32> to vector<1x128xf32>
    %7 = vector.extract_strided_slice %0 {offsets = [6, 0], sizes = [1, 128], strides = [1, 1]} : vector<16x128xf32> to vector<1x128xf32>
    %8 = vector.extract_strided_slice %0 {offsets = [7, 0], sizes = [1, 128], strides = [1, 1]} : vector<16x128xf32> to vector<1x128xf32>
    %9 = vector.extract_strided_slice %0 {offsets = [8, 0], sizes = [1, 128], strides = [1, 1]} : vector<16x128xf32> to vector<1x128xf32>
    %10 = vector.extract_strided_slice %0 {offsets = [9, 0], sizes = [1, 128], strides = [1, 1]} : vector<16x128xf32> to vector<1x128xf32>
    %11 = vector.extract_strided_slice %0 {offsets = [10, 0], sizes = [1, 128], strides = [1, 1]} : vector<16x128xf32> to vector<1x128xf32>
    %12 = vector.extract_strided_slice %0 {offsets = [11, 0], sizes = [1, 128], strides = [1, 1]} : vector<16x128xf32> to vector<1x128xf32>
    %13 = arith.subf %1, %4 : vector<1x128xf32>
    %14 = arith.subf %2, %5 : vector<1x128xf32>
    %15 = arith.subf %3, %6 : vector<1x128xf32>
    %16 = arith.divf %15, %9 : vector<1x128xf32>
    %17 = arith.divf %12, %9 : vector<1x128xf32>
    %18 = arith.mulf %7, %10 : vector<1x128xf32>
    %19 = arith.mulf %8, %11 : vector<1x128xf32>
    %20 = arith.addf %18, %19 : vector<1x128xf32>
    %21 = arith.mulf %9, %12 : vector<1x128xf32>
    %22 = arith.addf %20, %21 : vector<1x128xf32>
    %cst = arith.constant 2.000000e+00 : f32
    %23 = vector.broadcast %cst : f32 to vector<1x128xf32>
    %24 = arith.mulf %23, %22 : vector<1x128xf32>
    %25 = arith.subf %17, %24 : vector<1x128xf32>
    %26 = arith.mulf %17, %25 : vector<1x128xf32>
    %cst_1 = arith.constant 1.000000e+00 : f32
    %27 = vector.broadcast %cst_1 : f32 to vector<1x128xf32>
    %28 = arith.addf %26, %27 : vector<1x128xf32>
    %cst_2 = arith.constant 2.000000e+00 : f32
    %29 = vector.broadcast %cst_2 : f32 to vector<1x128xf32>
    %30 = arith.mulf %29, %16 : vector<1x128xf32>
    %31 = arith.subf %17, %22 : vector<1x128xf32>
    %32 = arith.mulf %30, %31 : vector<1x128xf32>
    %33 = arith.mulf %13, %13 : vector<1x128xf32>
    %34 = arith.mulf %14, %14 : vector<1x128xf32>
    %35 = arith.addf %33, %34 : vector<1x128xf32>
    %36 = arith.mulf %15, %15 : vector<1x128xf32>
    %37 = arith.addf %35, %36 : vector<1x128xf32>
    %38 = arith.mulf %16, %16 : vector<1x128xf32>
    %39 = arith.subf %38, %37 : vector<1x128xf32>
    %40 = arith.mulf %32, %32 : vector<1x128xf32>
    %cst_3 = arith.constant 4.000000e+00 : f32
    %41 = vector.broadcast %cst_3 : f32 to vector<1x128xf32>
    %42 = arith.mulf %41, %28 : vector<1x128xf32>
    %43 = arith.mulf %42, %39 : vector<1x128xf32>
    %44 = arith.subf %40, %43 : vector<1x128xf32>
    %cst_4 = arith.constant 0.000000e+00 : f32
    %45 = vector.broadcast %cst_4 : f32 to vector<1x128xf32>
    %46 = arith.subf %45, %32 : vector<1x128xf32>
    %47 = math.sqrt %44 : vector<1x128xf32>
    %cst_5 = arith.constant 2.000000e+00 : f32
    %48 = vector.broadcast %cst_5 : f32 to vector<1x128xf32>
    %49 = arith.mulf %48, %28 : vector<1x128xf32>
    %50 = arith.divf %47, %49 : vector<1x128xf32>
    %51 = arith.addf %46, %50 : vector<1x128xf32>
    %52 = arith.mulf %17, %51 : vector<1x128xf32>
    %53 = arith.addf %16, %52 : vector<1x128xf32>
    %54 = arith.mulf %53, %7 : vector<1x128xf32>
    %55 = arith.mulf %53, %8 : vector<1x128xf32>
    %56 = arith.mulf %53, %9 : vector<1x128xf32>
    %57 = arith.mulf %51, %10 : vector<1x128xf32>
    %58 = arith.mulf %51, %11 : vector<1x128xf32>
    %59 = arith.subf %54, %57 : vector<1x128xf32>
    %60 = arith.subf %55, %58 : vector<1x128xf32>
    %61 = math.rsqrt %37 : vector<1x128xf32>
    %62 = arith.mulf %13, %61 : vector<1x128xf32>
    %63 = arith.mulf %14, %61 : vector<1x128xf32>
    %64 = arith.mulf %62, %59 : vector<1x128xf32>
    %65 = arith.mulf %63, %60 : vector<1x128xf32>
    %66 = arith.addf %64, %65 : vector<1x128xf32>
    %cst_6 = arith.constant 0.000000e+00 : f32
    %67 = vector.broadcast %cst_6 : f32 to vector<1x128xf32>
    %68 = arith.subf %67, %63 : vector<1x128xf32>
    %69 = arith.mulf %68, %59 : vector<1x128xf32>
    %70 = arith.mulf %62, %60 : vector<1x128xf32>
    %71 = arith.addf %69, %70 : vector<1x128xf32>
    %72 = arith.mulf %66, %66 : vector<1x128xf32>
    %73 = arith.mulf %71, %71 : vector<1x128xf32>
    %74 = arith.addf %72, %73 : vector<1x128xf32>
    %75 = math.rsqrt %74 : vector<1x128xf32>
    %76 = arith.mulf %66, %75 : vector<1x128xf32>
    %77 = arith.mulf %71, %75 : vector<1x128xf32>
    %78 = arith.mulf %76, %1 : vector<1x128xf32>
    %79 = arith.mulf %77, %2 : vector<1x128xf32>
    %80 = arith.subf %78, %79 : vector<1x128xf32>
    %81 = arith.subf %54, %80 : vector<1x128xf32>
    %82 = arith.mulf %77, %1 : vector<1x128xf32>
    %83 = arith.mulf %76, %2 : vector<1x128xf32>
    %84 = arith.addf %82, %83 : vector<1x128xf32>
    %85 = arith.subf %55, %84 : vector<1x128xf32>
    %86 = arith.subf %56, %3 : vector<1x128xf32>
    %cst_7 = arith.constant 0.000000e+00 : f32
    %87 = vector.broadcast %cst_7 : f32 to vector<1x128xf32>
    %cst_8 = arith.constant 1.000000e+00 : f32
    %88 = vector.broadcast %cst_8 : f32 to vector<1x128xf32>
    %c0_9 = arith.constant 0 : index
    %c0_10 = arith.constant 0 : index
    %89 = vector.load %arg3[%c0_9, %c0_10] : memref<16x128xf32, #tpu.memory_space<vmem>>, vector<1x128xf32>
    tpu.vector_store %arg3[%c0_9, %c0_10], %76 {strides = array<i32>} : memref<16x128xf32, #tpu.memory_space<vmem>>, vector<1x128xf32>,
    %cst_11 = arith.constant 0.000000e+00 : f32
    %90 = vector.broadcast %cst_11 : f32 to vector<1x128xf32>
    %91 = arith.subf %90, %77 : vector<1x128xf32>
    %c1 = arith.constant 1 : index
    %c0_12 = arith.constant 0 : index
    %92 = vector.load %arg3[%c1, %c0_12] : memref<16x128xf32, #tpu.memory_space<vmem>>, vector<1x128xf32>
    tpu.vector_store %arg3[%c1, %c0_12], %91 {strides = array<i32>} : memref<16x128xf32, #tpu.memory_space<vmem>>, vector<1x128xf32>,
    %c2 = arith.constant 2 : index
    %c0_13 = arith.constant 0 : index
    %93 = vector.load %arg3[%c2, %c0_13] : memref<16x128xf32, #tpu.memory_space<vmem>>, vector<1x128xf32>
    tpu.vector_store %arg3[%c2, %c0_13], %87 {strides = array<i32>} : memref<16x128xf32, #tpu.memory_space<vmem>>, vector<1x128xf32>,
    %c3 = arith.constant 3 : index
    %c0_14 = arith.constant 0 : index
    %94 = vector.load %arg3[%c3, %c0_14] : memref<16x128xf32, #tpu.memory_space<vmem>>, vector<1x128xf32>
    tpu.vector_store %arg3[%c3, %c0_14], %77 {strides = array<i32>} : memref<16x128xf32, #tpu.memory_space<vmem>>, vector<1x128xf32>,
    %c4 = arith.constant 4 : index
    %c0_15 = arith.constant 0 : index
    %95 = vector.load %arg3[%c4, %c0_15] : memref<16x128xf32, #tpu.memory_space<vmem>>, vector<1x128xf32>
    tpu.vector_store %arg3[%c4, %c0_15], %76 {strides = array<i32>} : memref<16x128xf32, #tpu.memory_space<vmem>>, vector<1x128xf32>,
    %c5 = arith.constant 5 : index
    %c0_16 = arith.constant 0 : index
    %96 = vector.load %arg3[%c5, %c0_16] : memref<16x128xf32, #tpu.memory_space<vmem>>, vector<1x128xf32>
    tpu.vector_store %arg3[%c5, %c0_16], %87 {strides = array<i32>} : memref<16x128xf32, #tpu.memory_space<vmem>>, vector<1x128xf32>,
    %c6 = arith.constant 6 : index
    %c0_17 = arith.constant 0 : index
    %97 = vector.load %arg3[%c6, %c0_17] : memref<16x128xf32, #tpu.memory_space<vmem>>, vector<1x128xf32>
    tpu.vector_store %arg3[%c6, %c0_17], %87 {strides = array<i32>} : memref<16x128xf32, #tpu.memory_space<vmem>>, vector<1x128xf32>,
    %c7 = arith.constant 7 : index
    %c0_18 = arith.constant 0 : index
    %98 = vector.load %arg3[%c7, %c0_18] : memref<16x128xf32, #tpu.memory_space<vmem>>, vector<1x128xf32>
    tpu.vector_store %arg3[%c7, %c0_18], %87 {strides = array<i32>} : memref<16x128xf32, #tpu.memory_space<vmem>>, vector<1x128xf32>,
    %c8 = arith.constant 8 : index
    %c0_19 = arith.constant 0 : index
    %99 = vector.load %arg3[%c8, %c0_19] : memref<16x128xf32, #tpu.memory_space<vmem>>, vector<1x128xf32>
    tpu.vector_store %arg3[%c8, %c0_19], %88 {strides = array<i32>} : memref<16x128xf32, #tpu.memory_space<vmem>>, vector<1x128xf32>,
    %c9 = arith.constant 9 : index
    %c0_20 = arith.constant 0 : index
    %100 = vector.load %arg3[%c9, %c0_20] : memref<16x128xf32, #tpu.memory_space<vmem>>, vector<1x128xf32>
    tpu.vector_store %arg3[%c9, %c0_20], %81 {strides = array<i32>} : memref<16x128xf32, #tpu.memory_space<vmem>>, vector<1x128xf32>,
    %c10 = arith.constant 10 : index
    %c0_21 = arith.constant 0 : index
    %101 = vector.load %arg3[%c10, %c0_21] : memref<16x128xf32, #tpu.memory_space<vmem>>, vector<1x128xf32>
    tpu.vector_store %arg3[%c10, %c0_21], %85 {strides = array<i32>} : memref<16x128xf32, #tpu.memory_space<vmem>>, vector<1x128xf32>,
    %c11 = arith.constant 11 : index
    %c0_22 = arith.constant 0 : index
    %102 = vector.load %arg3[%c11, %c0_22] : memref<16x128xf32, #tpu.memory_space<vmem>>, vector<1x128xf32>
    tpu.vector_store %arg3[%c11, %c0_22], %86 {strides = array<i32>} : memref<16x128xf32, #tpu.memory_space<vmem>>, vector<1x128xf32>,
    %c12 = arith.constant 12 : index
    %c0_23 = arith.constant 0 : index
    %103 = vector.load %arg3[%c12, %c0_23] : memref<16x128xf32, #tpu.memory_space<vmem>>, vector<1x128xf32>
    tpu.vector_store %arg3[%c12, %c0_23], %66 {strides = array<i32>} : memref<16x128xf32, #tpu.memory_space<vmem>>, vector<1x128xf32>,
    %c13 = arith.constant 13 : index
    %c0_24 = arith.constant 0 : index
    %104 = vector.load %arg3[%c13, %c0_24] : memref<16x128xf32, #tpu.memory_space<vmem>>, vector<1x128xf32>
    tpu.vector_store %arg3[%c13, %c0_24], %71 {strides = array<i32>} : memref<16x128xf32, #tpu.memory_space<vmem>>, vector<1x128xf32>,
    %c14 = arith.constant 14 : index
    %c0_25 = arith.constant 0 : index
    %105 = vector.load %arg3[%c14, %c0_25] : memref<16x128xf32, #tpu.memory_space<vmem>>, vector<1x128xf32>
    tpu.vector_store %arg3[%c14, %c0_25], %44 {strides = array<i32>} : memref<16x128xf32, #tpu.memory_space<vmem>>, vector<1x128xf32>,
    %cst_26 = arith.constant 0.000000e+00 : f32
    %106 = vector.broadcast %cst_26 : f32 to vector<1x128xf32>
    %c0_i32 = arith.constant 0 : i32
    %c8_i32 = arith.constant 8 : i32
    %107 = arith.muli %c0_i32, %c8_i32 : i32
    %108 = tpu.assume_multiple %107, 8 : i32
    %109 = arith.index_cast %108 : i32 to index
    %c0_27 = arith.constant 0 : index
    %110 = vector.load %arg2[%109, %c0_27] : memref<8x8xf32, #tpu.memory_space<vmem>>, vector<8x8xf32>
    %111 = vector.extract_strided_slice %110 {offsets = [0, 0], sizes = [8, 1], strides = [1, 1]} : vector<8x8xf32> to vector<8x1xf32>
    %112 = vector.extract_strided_slice %110 {offsets = [0, 1], sizes = [8, 1], strides = [1, 1]} : vector<8x8xf32> to vector<8x1xf32>
    %113 = vector.extract_strided_slice %110 {offsets = [0, 2], sizes = [8, 1], strides = [1, 1]} : vector<8x8xf32> to vector<8x1xf32>
    %114 = vector.extract_strided_slice %110 {offsets = [0, 3], sizes = [8, 1], strides = [1, 1]} : vector<8x8xf32> to vector<8x1xf32>
    %115 = vector.extract_strided_slice %110 {offsets = [0, 4], sizes = [8, 1], strides = [1, 1]} : vector<8x8xf32> to vector<8x1xf32>
    %116 = vector.extract_strided_slice %110 {offsets = [0, 5], sizes = [8, 1], strides = [1, 1]} : vector<8x8xf32> to vector<8x1xf32>
    %117 = vector.broadcast %76 : vector<1x128xf32> to vector<8x128xf32>
    %118 = vector.broadcast %111 : vector<8x1xf32> to vector<8x128xf32>
    %119 = arith.mulf %117, %118 : vector<8x128xf32>
    %120 = vector.broadcast %77 : vector<1x128xf32> to vector<8x128xf32>
    %121 = vector.broadcast %112 : vector<8x1xf32> to vector<8x128xf32>
    %122 = arith.mulf %120, %121 : vector<8x128xf32>
    %123 = arith.subf %119, %122 : vector<8x128xf32>
    %124 = vector.broadcast %81 : vector<1x128xf32> to vector<8x128xf32>
    %125 = arith.addf %123, %124 : vector<8x128xf32>
    %126 = vector.broadcast %77 : vector<1x128xf32> to vector<8x128xf32>
    %127 = vector.broadcast %111 : vector<8x1xf32> to vector<8x128xf32>
    %128 = arith.mulf %126, %127 : vector<8x128xf32>
    %129 = vector.broadcast %76 : vector<1x128xf32> to vector<8x128xf32>
    %130 = vector.broadcast %112 : vector<8x1xf32> to vector<8x128xf32>
    %131 = arith.mulf %129, %130 : vector<8x128xf32>
    %132 = arith.addf %128, %131 : vector<8x128xf32>
    %133 = vector.broadcast %85 : vector<1x128xf32> to vector<8x128xf32>
    %134 = arith.addf %132, %133 : vector<8x128xf32>
    %135 = vector.broadcast %113 : vector<8x1xf32> to vector<8x128xf32>
    %136 = vector.broadcast %86 : vector<1x128xf32> to vector<8x128xf32>
    %137 = arith.addf %135, %136 : vector<8x128xf32>
    %cst_28 = arith.constant 804.188477 : f32
    %138 = vector.broadcast %cst_28 : f32 to vector<8x128xf32>
    %139 = arith.mulf %138, %125 : vector<8x128xf32>
    %cst_29 = arith.constant 1.280000e+02 : f32
    %140 = vector.broadcast %cst_29 : f32 to vector<8x128xf32>
    %141 = arith.mulf %140, %137 : vector<8x128xf32>
    %142 = arith.addf %139, %141 : vector<8x128xf32>
    %143 = arith.divf %142, %137 : vector<8x128xf32>
    %cst_30 = arith.constant 804.188477 : f32
    %144 = vector.broadcast %cst_30 : f32 to vector<8x128xf32>
    %145 = arith.mulf %144, %134 : vector<8x128xf32>
    %cst_31 = arith.constant 1.280000e+02 : f32
    %146 = vector.broadcast %cst_31 : f32 to vector<8x128xf32>
    %147 = arith.mulf %146, %137 : vector<8x128xf32>
    %148 = arith.addf %145, %147 : vector<8x128xf32>
    %149 = arith.divf %148, %137 : vector<8x128xf32>
    %150 = vector.broadcast %114 : vector<8x1xf32> to vector<8x128xf32>
    %151 = arith.subf %143, %150 : vector<8x128xf32>
    %152 = vector.broadcast %115 : vector<8x1xf32> to vector<8x128xf32>
    %153 = arith.subf %149, %152 : vector<8x128xf32>
    %154 = arith.mulf %151, %151 : vector<8x128xf32>
    %155 = arith.mulf %153, %153 : vector<8x128xf32>
    %156 = arith.addf %154, %155 : vector<8x128xf32>
    %157 = math.sqrt %156 : vector<8x128xf32>
    %cst_32 = arith.constant 4.000000e+00 : f32
    %158 = vector.broadcast %cst_32 : f32 to vector<8x128xf32>
    %159 = arith.subf %158, %157 : vector<8x128xf32>
    %cst_33 = arith.constant 0.000000e+00 : f32
    %160 = vector.broadcast %cst_33 : f32 to vector<8x128xf32>
    %161 = arith.cmpf ogt, %159, %160 : vector<8x128xf32>
    %cst_34 = arith.constant 0.000000e+00 : f32
    %162 = vector.broadcast %cst_34 : f32 to vector<8x128xf32>
    %163 = arith.select %161, %159, %162 : vector<8x128xi1>, vector<8x128xf32>
    %cst_35 = arith.constant 0.000000e+00 : f32
    %164 = vector.broadcast %cst_35 : f32 to vector<8x1xf32>
    %165 = arith.cmpf ogt, %116, %164 : vector<8x1xf32>
    %cst_36 = arith.constant 0.000000e+00 : f32
    %166 = vector.shape_cast %165 : vector<8x1xi1> to vector<8x1xi1>
    %167 = vector.broadcast %166 : vector<8x1xi1> to vector<8x128xi1>
    %168 = vector.broadcast %cst_36 : f32 to vector<8x128xf32>
    %169 = arith.select %167, %163, %168 : vector<8x128xi1>, vector<8x128xf32>
    %cst_37 = arith.constant dense<0.000000e+00> : vector<128xf32>
    %170 = vector.multi_reduction <add>, %169, %cst_37 [0] : vector<8x128xf32> to vector<128xf32>
    %171 = vector.shape_cast %170 : vector<128xf32> to vector<1x128xf32>
    %172 = arith.addf %106, %171 : vector<1x128xf32>
    %c1_i32 = arith.constant 1 : i32
    %cst_38 = arith.constant 1.000000e+01 : f32
    %173 = vector.broadcast %cst_38 : f32 to vector<1x128xf32>
    %174 = arith.mulf %172, %173 : vector<1x128xf32>
    %c15 = arith.constant 15 : index
    %c0_39 = arith.constant 0 : index
    %175 = vector.load %arg3[%c15, %c0_39] : memref<16x128xf32, #tpu.memory_space<vmem>>, vector<1x128xf32>
    tpu.vector_store %arg3[%c15, %c0_39], %174 {strides = array<i32>} : memref<16x128xf32, #tpu.memory_space<vmem>>, vector<1x128xf32>,
    return
  }
  func.func @transform_0(%arg0: i32) -> (i32, i32) {
    %c0_i32 = arith.constant 0 : i32
    %c0_i32_0 = arith.constant 0 : i32
    return %c0_i32, %arg0 : i32, i32
  }
  func.func @transform_1(%arg0: i32) -> (i32, i32) {
    %c0_i32 = arith.constant 0 : i32
    %c0_i32_0 = arith.constant 0 : i32
    %c0_i32_1 = arith.constant 0 : i32
    return %c0_i32, %c0_i32_0 : i32, i32
  }
  func.func @transform_2(%arg0: i32) -> (i32, i32) {
    %c0_i32 = arith.constant 0 : i32
    %c0_i32_0 = arith.constant 0 : i32
    return %c0_i32, %arg0 : i32, i32
  }
}

</mosaic_0001>

<llo_original>
// kernel: _forward_core.3
$region0: #{_forward_core.3}
  #allocation0 [shape = 'u32[]', space=smem, size = 0x4, offset = 0x4, fixed_abs, tag = 'smem constant byte address 0x4 - core index']
  #allocation1 [shape = 'u32[144,128]{1,0:T(1,128)}', space=vmem, size = 0x12000, scoped, tag = 'internal scratch']
  %s0 = inlined_call_operand.vmem [shape: f32[16,128], index: 0, kind: input, shape index: {}]
  %s1 = inlined_call_operand.vmem [shape: f32[8,8], index: 1, kind: input, shape index: {}]
  %s2 = inlined_call_operand.vmem [shape: f32[16,128], index: 2, kind: output, shape index: {}]
  %s3 = sld [smem:[#allocation0]]
  $region18: #{_forward_core.3} parent=0
    _
  %s5 = ssub.s32 1, %s3
  %s6 = scalar_select 0, %s5, %s3
  // Predicated region
  $region2: #{_forward_core.3} parent=0 // pred_check
    _
  $region3: #{_forward_core.3} parent=0 // pred_check_branch
    %8 = sbr.rel (0) target = $region5
  $region4: #{_forward_core.3} parent=0 // pred_region
    _
  $region5: #{_forward_core.3} parent=0 // pred_fallthru
    _
  // Predicated region
  $region6: #{_forward_core.3} parent=0 // pred_check
    _
  $region7: #{_forward_core.3} parent=0 // pred_check_branch
    %10 = sbr.rel (0) target = $region9
  $region8: #{_forward_core.3} parent=0 // pred_region
    _
  $region9: #{_forward_core.3} parent=0 // pred_fallthru
    _
  %v11 = vld [vmem:[%s0] sm:$0xff]
  %v12 = vld [vmem:[%s0 + $0x8] sm:$0xff]
  %v14 = vrot.slane %v11, 3
  %v16 = vsub.f32 %v11, %v14
  %v18 = vrot.slane %v12, 6
  %v20 = vrcp.pop %v18
  %v21 = vmul.f32 %v16, %v20
  %v22 = vrot.slane %v12, 5
  %v24 = vrcp.pop %v22
  %v25 = vmul.f32 %v12, %v24
  %v26 = vrot.slane %v12, 3
  %v28 = vmul.f32 %v11, %v26
  %v30 = vrot.slane %v28, 1
  %v32 = vadd.f32 %v28, %v30
  %v33 = vmul.f32 %v12, %v26
  %v35 = vrot.slane %v33, 2
  %v37 = vadd.f32 %v32, %v35
  %v38 = vmul.f32 %v37, 2.0
  %v40 = vrot.slane %v38, 3
  %v42 = vsub.f32 %v25, %v40
  %v43 = vmul.f32 %v25, %v42
  %v44 = vadd.f32 %v43, 1.0
  %v45 = vmul.f32 %v21, 2.0
  %v47 = vrot.slane %v37, 3
  %v49 = vsub.f32 %v25, %v47
  %v51 = vrot.slane %v49, 1
  %v53 = vmul.f32 %v45, %v51
  %v54 = vmul.f32 %v16, %v16
  %v56 = vrot.slane %v54, 1
  %v58 = vadd.f32 %v54, %v56
  %v59 = vrot.slane %v54, 2
  %v61 = vadd.f32 %v58, %v59
  %v62 = vmul.f32 %v21, %v21
  %v64 = vrot.slane %v61, 6
  %v66 = vsub.f32 %v62, %v64
  %v67 = vmul.f32 %v53, %v53
  %v68 = vmul.f32 %v44, 4.0
  %v70 = vrot.slane %v66, 7
  %v72 = vmul.f32 %v68, %v70
  %v74 = vrot.slane %v72, 1
  %v76 = vsub.f32 %v67, %v74
  %v77 = vsub.f32 0.0, %v53
  %v78 = vrsqrt.pop %v76
  %v79 = vmul.f32 %v76, %v78
  %vm80 = vcmp.eq.f32.partialorder %v76, inf
  %v81 = vsel %vm80, %v76, %v79
  %vm82 = vcmp.eq.f32.partialorder %v76, 0.0
  %v83 = vand.u32 %v76, 2147483648
  %v84 = vsel %vm82, %v83, %v81
  %v85 = vmul.f32 %v44, 2.0
  %v87 = vrot.slane %v85, 1
  %v89 = vrcp.pop %v87
  %v90 = vmul.f32 %v84, %v89
  %v91 = vadd.f32 %v77, %v90
  %v93 = vrot.slane %v91, 7
  %v95 = vmul.f32 %v25, %v93
  %v97 = vrot.slane %v95, 1
  %v99 = vadd.f32 %v21, %v97
  %v100 = vrot.slane %v11, 4
  %v102 = vmul.f32 %v99, %v100
  %v103 = vrot.slane %v11, 5
  %v105 = vmul.f32 %v99, %v103
  %v106 = vmul.f32 %v99, %v18
  %v107 = vrot.slane %v12, 7
  %v109 = vmul.f32 %v91, %v107
  %v110 = vmul.f32 %v91, %v12
  %v111 = vsub.f32 %v102, %v109
  %v112 = vsub.f32 %v105, %v110
  %v113 = vrsqrt.pop %v61
  %v114 = vmul.f32 %v16, %v113
  %v116 = vrot.slane %v113, 7
  %v118 = vmul.f32 %v16, %v116
  %v120 = vrot.slane %v111, 2
  %v122 = vmul.f32 %v114, %v120
  %v124 = vrot.slane %v112, 1
  %v126 = vmul.f32 %v118, %v124
  %v128 = vrot.slane %v126, 1
  %v130 = vadd.f32 %v122, %v128
  %v131 = vsub.f32 0.0, %v118
  %v132 = vrot.slane %v111, 1
  %v134 = vmul.f32 %v131, %v132
  %v135 = vrot.slane %v112, 2
  %v137 = vmul.f32 %v114, %v135
  %v139 = vrot.slane %v137, 7
  %v141 = vadd.f32 %v134, %v139
  %v142 = vmul.f32 %v130, %v130
  %v143 = vmul.f32 %v141, %v141
  %v145 = vrot.slane %v143, 1
  %v147 = vadd.f32 %v142, %v145
  %v148 = vrsqrt.pop %v147
  %v149 = vmul.f32 %v130, %v148
  %v151 = vrot.slane %v148, 7
  %v153 = vmul.f32 %v141, %v151
  %v154 = vmul.f32 %v149, %v11
  %v155 = vmul.f32 %v153, %v11
  %v157 = vrot.slane %v155, 1
  %v159 = vsub.f32 %v154, %v157
  %v161 = vrot.slane %v159, 6
  %v163 = vsub.f32 %v102, %v161
  %v164 = vrot.slane %v11, 7
  %v166 = vmul.f32 %v153, %v164
  %v167 = vrot.slane %v11, 1
  %v169 = vmul.f32 %v149, %v167
  %v171 = vrot.slane %v169, 7
  %v173 = vadd.f32 %v166, %v171
  %v175 = vrot.slane %v173, 7
  %v177 = vsub.f32 %v105, %v175
  %v178 = vsub.f32 %v106, %v11
  %179 = vst [vmem:[%s2] sm:$0x1] %v149
  %v180 = vsub.f32 0.0, %v153
  %181 = vst [vmem:[%s2] sm:$0x2] %v180
  %182 = vst [vmem:[%s2 + $0x2] sm:$0x1] 0.0
  %183 = vst [vmem:[%s2 + $0x2] sm:$0x2] %v153
  %184 = vst [vmem:[%s2 + $0x4] sm:$0x1] %v149
  %185 = vst [vmem:[%s2 + $0x5] sm:$0x1] 0.0
  %186 = vst [vmem:[%s2 + $0x6] sm:$0x1] 0.0
  %187 = vst [vmem:[%s2 + $0x7] sm:$0x1] 0.0
  %188 = vst [vmem:[%s2 + $0x8] sm:$0x1] 1.0
  %189 = vst [vmem:[%s2 + $0x7] sm:$0x4] %v163
  %190 = vst [vmem:[%s2 + $0x8] sm:$0x4] %v177
  %191 = vst [vmem:[%s2 + $0x9] sm:$0x4] %v178
  %192 = vst [vmem:[%s2 + $0xc] sm:$0x1] %v130
  %193 = vst [vmem:[%s2 + $0xc] sm:$0x2] %v141
  %194 = vst [vmem:[%s2 + $0xc] sm:$0x4] %v76
  %v195 = vld [vmem:[%s1] sm:$0xff]
  %v196 = vlaneseq
  %v197 = vshrl.u32 %v196, 7
  %v198 = vsub.s32 0, %v197
  %v199 = vrot.slane %v149, %v198
  %201 = vset.pattern.permute.xlu0 0
  %202 = vperm.xlu0 %201, %v195
  %v203 = vpop.permute.xlu0 %202
  %v205 = vmul.f32 %v199, %v203
  %v206 = vlaneseq
  %v207 = vshrl.u32 %v206, 7
  %v208 = vsub.s32 1, %v207
  %v209 = vrot.slane %v153, %v208
  %210 = vset.pattern.permute.xlu0 1
  %211 = vperm.xlu0 %210, %v195
  %v212 = vpop.permute.xlu0 %211
  %v214 = vmul.f32 %v209, %v212
  %v215 = vsub.f32 %v205, %v214
  %v216 = vlaneseq
  %v217 = vshrl.u32 %v216, 7
  %v218 = vsub.s32 2, %v217
  %v219 = vrot.slane %v163, %v218
  %v220 = vadd.f32 %v215, %v219
  %v221 = vmul.f32 %v209, %v203
  %v222 = vmul.f32 %v199, %v212
  %v223 = vadd.f32 %v221, %v222
  %v224 = vlaneseq
  %v225 = vshrl.u32 %v224, 7
  %v226 = vsub.s32 2, %v225
  %v227 = vrot.slane %v177, %v226
  %v228 = vadd.f32 %v223, %v227
  %229 = vset.pattern.permute.xlu0 2
  %230 = vperm.xlu0 %229, %v195
  %v231 = vpop.permute.xlu0 %230
  %v233 = vlaneseq
  %v234 = vshrl.u32 %v233, 7
  %v235 = vsub.s32 2, %v234
  %v236 = vrot.slane %v178, %v235
  %v237 = vadd.f32 %v231, %v236
  %v238 = vmul.f32 %v220, 804.1885
  %v239 = vmul.f32 %v237, 128.0
  %v240 = vadd.f32 %v238, %v239
  %v241 = vrcp.pop %v237
  %v242 = vmul.f32 %v240, %v241
  %v243 = vmul.f32 %v228, 804.1885
  %v244 = vadd.f32 %v243, %v239
  %v245 = vmul.f32 %v244, %v241
  %246 = vset.pattern.permute.xlu0 3
  %247 = vperm.xlu0 %246, %v195
  %v248 = vpop.permute.xlu0 %247
  %v250 = vsub.f32 %v242, %v248
  %251 = vset.pattern.permute.xlu0 4
  %252 = vperm.xlu0 %251, %v195
  %v253 = vpop.permute.xlu0 %252
  %v255 = vsub.f32 %v245, %v253
  %v256 = vmul.f32 %v250, %v250
  %v257 = vmul.f32 %v255, %v255
  %v258 = vadd.f32 %v256, %v257
  %v259 = vrsqrt.pop %v258
  %v260 = vmul.f32 %v258, %v259
  %vm261 = vcmp.eq.f32.partialorder %v258, inf
  %v262 = vsel %vm261, %v258, %v260
  %vm263 = vcmp.eq.f32.partialorder %v258, 0.0
  %v264 = vand.u32 %v258, 2147483648
  %v265 = vsel %vm263, %v264, %v262
  %v266 = vsub.f32 4.0, %v265
  %vm267 = vcmp.gt.f32.partialorder %v266, 0.0
  %v268 = vsel %vm267, %v266, 0.0
  %vm269 = vcmp.gt.f32.partialorder %v195, 0.0
  %v270 = vsel %vm269, 1, 0
  %271 = vset.pattern.permute.xlu0 5
  %272 = vperm.xlu0 %271, %v270
  %v273 = vpop.permute.xlu0 %272
  %vm274 = vcmp.eq.s32.totalorder %v273, 1
  %v275 = vsel %vm274, %v268, 0.0
  %v276 = vrot.slane %v275, 4
  %v277 = vadd.f32 %v275, %v276
  %v278 = vrot.slane %v277, 2
  %v279 = vadd.f32 %v277, %v278
  %v280 = vrot.slane %v279, 1
  %v281 = vadd.f32 %v279, %v280
  %v282 = vadd.f32 %v281, 0.0
  %v283 = vmul.f32 %v282, 10.0
  %284 = vst [vmem:[%s2 + $0xf] sm:$0x1] %v283
  // Predicated region
  $region10: #{_forward_core.3} parent=0 // pred_check
    _
  $region11: #{_forward_core.3} parent=0 // pred_check_branch
    %286 = sbr.rel (0) target = $region13
  $region12: #{_forward_core.3} parent=0 // pred_region
    _
  $region13: #{_forward_core.3} parent=0 // pred_fallthru
    _
  // Predicated region
  $region14: #{_forward_core.3} parent=0 // pred_check
    _
  $region15: #{_forward_core.3} parent=0 // pred_check_branch
    %288 = sbr.rel (0) target = $region17
  $region16: #{_forward_core.3} parent=0 // pred_region
    _
  $region17: #{_forward_core.3} parent=0 // pred_fallthru
    _

// kernel: _forward_core.2
$region0: #{_forward_core.2}
  #allocation0 [shape = 'u32[]', space=smem, size = 0x4, offset = 0x4, fixed_abs, tag = 'smem constant byte address 0x4 - core index']
  #allocation1 [shape = 'u32[144,128]{1,0:T(1,128)}', space=vmem, size = 0x12000, scoped, tag = 'internal scratch']
  #allocation2 [shape = 'bf16[256,128]{1,0:T(8,128)(2,1)}', space=vmem, size = 0x10000, scoped, tag = 'scratch operand']
  %s0 = inlined_call_operand.vmem [shape: f32[8,256], index: 0, kind: input, shape index: {}]
  %s1 = inlined_call_operand.vmem [shape: f32[8,128], index: 1, kind: output, shape index: {}]
  %s2 = sld [smem:[#allocation0]]
  $region18: #{_forward_core.2} parent=0
    _
  %s4 = ssub.s32 1, %s2
  %s5 = scalar_select 0, %s4, %s2
  // Predicated region
  $region2: #{_forward_core.2} parent=0 // pred_check
    _
  $region3: #{_forward_core.2} parent=0 // pred_check_branch
    %7 = sbr.rel (0) target = $region5
  $region4: #{_forward_core.2} parent=0 // pred_region
    _
  $region5: #{_forward_core.2} parent=0 // pred_fallthru
    _
  %p9 = scmp.eq.s32.totalorder 0, 0
  // Predicated region
  $region6: #{_forward_core.2} parent=0 // pred_check
    %p10 = pneg %p9
  $region7: #{_forward_core.2} parent=0 // pred_check_branch
    %12 = sbr.rel (%p10) target = $region9
  $region8: #{_forward_core.2} parent=0 // pred_region
    %v13 = vlaneseq
    %v14 = vshrl.u32 %v13, 7
    %v15 = vadd.s32 %v14, 8
    %v16 = vadd.s32 %v14, 16
    %v17 = vadd.s32 %v14, 24
    %v18 = vadd.s32 %v14, 32
    %v19 = vadd.s32 %v14, 40
    %v20 = vadd.s32 %v14, 48
    %v21 = vadd.s32 %v14, 56
    %v22 = vadd.s32 %v14, 64
    %v23 = vadd.s32 %v14, 72
    %v24 = vadd.s32 %v14, 80
    %v25 = vadd.s32 %v14, 88
    %v26 = vadd.s32 %v14, 96
    %v27 = vadd.s32 %v14, 104
    %v28 = vadd.s32 %v14, 112
    %v29 = vadd.s32 %v14, 120
    %v30 = vadd.s32 %v14, 128
    %v31 = vadd.s32 %v14, 136
    %v32 = vadd.s32 %v14, 144
    %v33 = vadd.s32 %v14, 152
    %v34 = vadd.s32 %v14, 160
    %v35 = vadd.s32 %v14, 168
    %v36 = vadd.s32 %v14, 176
    %v37 = vadd.s32 %v14, 184
    %v38 = vadd.s32 %v14, 192
    %v39 = vadd.s32 %v14, 200
    %v40 = vadd.s32 %v14, 208
    %v41 = vadd.s32 %v14, 216
    %v42 = vadd.s32 %v14, 224
    %v43 = vadd.s32 %v14, 232
    %v44 = vadd.s32 %v14, 240
    %v45 = vadd.s32 %v14, 248
    %v46 = vcvt.s32.f32 %v14
    %v47 = vcvt.s32.f32 %v15
    %v48 = vcvt.s32.f32 %v16
    %v49 = vcvt.s32.f32 %v17
    %v50 = vcvt.s32.f32 %v18
    %v51 = vcvt.s32.f32 %v19
    %v52 = vcvt.s32.f32 %v20
    %v53 = vcvt.s32.f32 %v21
    %v54 = vcvt.s32.f32 %v22
    %v55 = vcvt.s32.f32 %v23
    %v56 = vcvt.s32.f32 %v24
    %v57 = vcvt.s32.f32 %v25
    %v58 = vcvt.s32.f32 %v26
    %v59 = vcvt.s32.f32 %v27
    %v60 = vcvt.s32.f32 %v28
    %v61 = vcvt.s32.f32 %v29
    %v62 = vcvt.s32.f32 %v30
    %v63 = vcvt.s32.f32 %v31
    %v64 = vcvt.s32.f32 %v32
    %v65 = vcvt.s32.f32 %v33
    %v66 = vcvt.s32.f32 %v34
    %v67 = vcvt.s32.f32 %v35
    %v68 = vcvt.s32.f32 %v36
    %v69 = vcvt.s32.f32 %v37
    %v70 = vcvt.s32.f32 %v38
    %v71 = vcvt.s32.f32 %v39
    %v72 = vcvt.s32.f32 %v40
    %v73 = vcvt.s32.f32 %v41
    %v74 = vcvt.s32.f32 %v42
    %v75 = vcvt.s32.f32 %v43
    %v76 = vcvt.s32.f32 %v44
    %v77 = vcvt.s32.f32 %v45
    %v78 = vlaneseq
    %v79 = vand.u32 %v78, 127
    %v80 = vadd.f32 %v46, 0.5
    %v81 = vadd.f32 %v47, 0.5
    %v82 = vadd.f32 %v48, 0.5
    %v83 = vadd.f32 %v49, 0.5
    %v84 = vadd.f32 %v50, 0.5
    %v85 = vadd.f32 %v51, 0.5
    %v86 = vadd.f32 %v52, 0.5
    %v87 = vadd.f32 %v53, 0.5
    %v88 = vadd.f32 %v54, 0.5
    %v89 = vadd.f32 %v55, 0.5
    %v90 = vadd.f32 %v56, 0.5
    %v91 = vadd.f32 %v57, 0.5
    %v92 = vadd.f32 %v58, 0.5
    %v93 = vadd.f32 %v59, 0.5
    %v94 = vadd.f32 %v60, 0.5
    %v95 = vadd.f32 %v61, 0.5
    %v96 = vadd.f32 %v62, 0.5
    %v97 = vadd.f32 %v63, 0.5
    %v98 = vadd.f32 %v64, 0.5
    %v99 = vadd.f32 %v65, 0.5
    %v100 = vadd.f32 %v66, 0.5
    %v101 = vadd.f32 %v67, 0.5
    %v102 = vadd.f32 %v68, 0.5
    %v103 = vadd.f32 %v69, 0.5
    %v104 = vadd.f32 %v70, 0.5
    %v105 = vadd.f32 %v71, 0.5
    %v106 = vadd.f32 %v72, 0.5
    %v107 = vadd.f32 %v73, 0.5
    %v108 = vadd.f32 %v74, 0.5
    %v109 = vadd.f32 %v75, 0.5
    %v110 = vadd.f32 %v76, 0.5
    %v111 = vadd.f32 %v77, 0.5
    %v112 = vmul.f32 %v80, 0.0625
    %v113 = vmul.f32 %v81, 0.0625
    %v114 = vmul.f32 %v82, 0.0625
    %v115 = vmul.f32 %v83, 0.0625
    %v116 = vmul.f32 %v84, 0.0625
    %v117 = vmul.f32 %v85, 0.0625
    %v118 = vmul.f32 %v86, 0.0625
    %v119 = vmul.f32 %v87, 0.0625
    %v120 = vmul.f32 %v88, 0.0625
    %v121 = vmul.f32 %v89, 0.0625
    %v122 = vmul.f32 %v90, 0.0625
    %v123 = vmul.f32 %v91, 0.0625
    %v124 = vmul.f32 %v92, 0.0625
    %v125 = vmul.f32 %v93, 0.0625
    %v126 = vmul.f32 %v94, 0.0625
    %v127 = vmul.f32 %v95, 0.0625
    %v128 = vmul.f32 %v96, 0.0625
    %v129 = vmul.f32 %v97, 0.0625
    %v130 = vmul.f32 %v98, 0.0625
    %v131 = vmul.f32 %v99, 0.0625
    %v132 = vmul.f32 %v100, 0.0625
    %v133 = vmul.f32 %v101, 0.0625
    %v134 = vmul.f32 %v102, 0.0625
    %v135 = vmul.f32 %v103, 0.0625
    %v136 = vmul.f32 %v104, 0.0625
    %v137 = vmul.f32 %v105, 0.0625
    %v138 = vmul.f32 %v106, 0.0625
    %v139 = vmul.f32 %v107, 0.0625
    %v140 = vmul.f32 %v108, 0.0625
    %v141 = vmul.f32 %v109, 0.0625
    %v142 = vmul.f32 %v110, 0.0625
    %v143 = vmul.f32 %v111, 0.0625
    %v144 = vfloor.f32 %v112
    %v145 = vfloor.f32 %v113
    %v146 = vfloor.f32 %v114
    %v147 = vfloor.f32 %v115
    %v148 = vfloor.f32 %v116
    %v149 = vfloor.f32 %v117
    %v150 = vfloor.f32 %v118
    %v151 = vfloor.f32 %v119
    %v152 = vfloor.f32 %v120
    %v153 = vfloor.f32 %v121
    %v154 = vfloor.f32 %v122
    %v155 = vfloor.f32 %v123
    %v156 = vfloor.f32 %v124
    %v157 = vfloor.f32 %v125
    %v158 = vfloor.f32 %v126
    %v159 = vfloor.f32 %v127
    %v160 = vfloor.f32 %v128
    %v161 = vfloor.f32 %v129
    %v162 = vfloor.f32 %v130
    %v163 = vfloor.f32 %v131
    %v164 = vfloor.f32 %v132
    %v165 = vfloor.f32 %v133
    %v166 = vfloor.f32 %v134
    %v167 = vfloor.f32 %v135
    %v168 = vfloor.f32 %v136
    %v169 = vfloor.f32 %v137
    %v170 = vfloor.f32 %v138
    %v171 = vfloor.f32 %v139
    %v172 = vfloor.f32 %v140
    %v173 = vfloor.f32 %v141
    %v174 = vfloor.f32 %v142
    %v175 = vfloor.f32 %v143
    %v176 = vmul.f32 %v144, 16.0
    %v177 = vmul.f32 %v145, 16.0
    %v178 = vmul.f32 %v146, 16.0
    %v179 = vmul.f32 %v147, 16.0
    %v180 = vmul.f32 %v148, 16.0
    %v181 = vmul.f32 %v149, 16.0
    %v182 = vmul.f32 %v150, 16.0
    %v183 = vmul.f32 %v151, 16.0
    %v184 = vmul.f32 %v152, 16.0
    %v185 = vmul.f32 %v153, 16.0
    %v186 = vmul.f32 %v154, 16.0
    %v187 = vmul.f32 %v155, 16.0
    %v188 = vmul.f32 %v156, 16.0
    %v189 = vmul.f32 %v157, 16.0
    %v190 = vmul.f32 %v158, 16.0
    %v191 = vmul.f32 %v159, 16.0
    %v192 = vmul.f32 %v160, 16.0
    %v193 = vmul.f32 %v161, 16.0
    %v194 = vmul.f32 %v162, 16.0
    %v195 = vmul.f32 %v163, 16.0
    %v196 = vmul.f32 %v164, 16.0
    %v197 = vmul.f32 %v165, 16.0
    %v198 = vmul.f32 %v166, 16.0
    %v199 = vmul.f32 %v167, 16.0
    %v200 = vmul.f32 %v168, 16.0
    %v201 = vmul.f32 %v169, 16.0
    %v202 = vmul.f32 %v170, 16.0
    %v203 = vmul.f32 %v171, 16.0
    %v204 = vmul.f32 %v172, 16.0
    %v205 = vmul.f32 %v173, 16.0
    %v206 = vmul.f32 %v174, 16.0
    %v207 = vmul.f32 %v175, 16.0
    %v208 = vsub.f32 %v46, %v176
    %v209 = vsub.f32 %v47, %v177
    %v210 = vsub.f32 %v48, %v178
    %v211 = vsub.f32 %v49, %v179
    %v212 = vsub.f32 %v50, %v180
    %v213 = vsub.f32 %v51, %v181
    %v214 = vsub.f32 %v52, %v182
    %v215 = vsub.f32 %v53, %v183
    %v216 = vsub.f32 %v54, %v184
    %v217 = vsub.f32 %v55, %v185
    %v218 = vsub.f32 %v56, %v186
    %v219 = vsub.f32 %v57, %v187
    %v220 = vsub.f32 %v58, %v188
    %v221 = vsub.f32 %v59, %v189
    %v222 = vsub.f32 %v60, %v190
    %v223 = vsub.f32 %v61, %v191
    %v224 = vsub.f32 %v62, %v192
    %v225 = vsub.f32 %v63, %v193
    %v226 = vsub.f32 %v64, %v194
    %v227 = vsub.f32 %v65, %v195
    %v228 = vsub.f32 %v66, %v196
    %v229 = vsub.f32 %v67, %v197
    %v230 = vsub.f32 %v68, %v198
    %v231 = vsub.f32 %v69, %v199
    %v232 = vsub.f32 %v70, %v200
    %v233 = vsub.f32 %v71, %v201
    %v234 = vsub.f32 %v72, %v202
    %v235 = vsub.f32 %v73, %v203
    %v236 = vsub.f32 %v74, %v204
    %v237 = vsub.f32 %v75, %v205
    %v238 = vsub.f32 %v76, %v206
    %v239 = vsub.f32 %v77, %v207
    %vm240 = vcmp.eq.s32.totalorder %v79, 0
    %vm241 = vcmp.eq.s32.totalorder %v79, 1
    %vm242 = vcmp.eq.s32.totalorder %v79, 2
    %v243 = vsel %vm242, 1.0, 0.0
    %v244 = vsel %vm241, %v144, %v243
    %v245 = vsel %vm241, %v145, %v243
    %v246 = vsel %vm241, %v146, %v243
    %v247 = vsel %vm241, %v147, %v243
    %v248 = vsel %vm241, %v148, %v243
    %v249 = vsel %vm241, %v149, %v243
    %v250 = vsel %vm241, %v150, %v243
    %v251 = vsel %vm241, %v151, %v243
    %v252 = vsel %vm241, %v152, %v243
    %v253 = vsel %vm241, %v153, %v243
    %v254 = vsel %vm241, %v154, %v243
    %v255 = vsel %vm241, %v155, %v243
    %v256 = vsel %vm241, %v156, %v243
    %v257 = vsel %vm241, %v157, %v243
    %v258 = vsel %vm241, %v158, %v243
    %v259 = vsel %vm241, %v159, %v243
    %v260 = vsel %vm241, %v160, %v243
    %v261 = vsel %vm241, %v161, %v243
    %v262 = vsel %vm241, %v162, %v243
    %v263 = vsel %vm241, %v163, %v243
    %v264 = vsel %vm241, %v164, %v243
    %v265 = vsel %vm241, %v165, %v243
    %v266 = vsel %vm241, %v166, %v243
    %v267 = vsel %vm241, %v167, %v243
    %v268 = vsel %vm241, %v168, %v243
    %v269 = vsel %vm241, %v169, %v243
    %v270 = vsel %vm241, %v170, %v243
    %v271 = vsel %vm241, %v171, %v243
    %v272 = vsel %vm241, %v172, %v243
    %v273 = vsel %vm241, %v173, %v243
    %v274 = vsel %vm241, %v174, %v243
    %v275 = vsel %vm241, %v175, %v243
    %v276 = vsel %vm240, %v208, %v244
    %v277 = vsel %vm240, %v209, %v245
    %v278 = vsel %vm240, %v210, %v246
    %v279 = vsel %vm240, %v211, %v247
    %v280 = vsel %vm240, %v212, %v248
    %v281 = vsel %vm240, %v213, %v249
    %v282 = vsel %vm240, %v214, %v250
    %v283 = vsel %vm240, %v215, %v251
    %v284 = vsel %vm240, %v216, %v252
    %v285 = vsel %vm240, %v217, %v253
    %v286 = vsel %vm240, %v218, %v254
    %v287 = vsel %vm240, %v219, %v255
    %v288 = vsel %vm240, %v220, %v256
    %v289 = vsel %vm240, %v221, %v257
    %v290 = vsel %vm240, %v222, %v258
    %v291 = vsel %vm240, %v223, %v259
    %v292 = vsel %vm240, %v224, %v260
    %v293 = vsel %vm240, %v225, %v261
    %v294 = vsel %vm240, %v226, %v262
    %v295 = vsel %vm240, %v227, %v263
    %v296 = vsel %vm240, %v228, %v264
    %v297 = vsel %vm240, %v229, %v265
    %v298 = vsel %vm240, %v230, %v266
    %v299 = vsel %vm240, %v231, %v267
    %v300 = vsel %vm240, %v232, %v268
    %v301 = vsel %vm240, %v233, %v269
    %v302 = vsel %vm240, %v234, %v270
    %v303 = vsel %vm240, %v235, %v271
    %v304 = vsel %vm240, %v236, %v272
    %v305 = vsel %vm240, %v237, %v273
    %v306 = vsel %vm240, %v238, %v274
    %v307 = vsel %vm240, %v239, %v275
    %v308 = vpack.c.bf16 %v277, %v276
    %v309 = vpack.c.bf16 %v279, %v278
    %v310 = vpack.c.bf16 %v281, %v280
    %v311 = vpack.c.bf16 %v283, %v282
    %v312 = vpack.c.bf16 %v285, %v284
    %v313 = vpack.c.bf16 %v287, %v286
    %v314 = vpack.c.bf16 %v289, %v288
    %v315 = vpack.c.bf16 %v291, %v290
    %v316 = vpack.c.bf16 %v293, %v292
    %v317 = vpack.c.bf16 %v295, %v294
    %v318 = vpack.c.bf16 %v297, %v296
    %v319 = vpack.c.bf16 %v299, %v298
    %v320 = vpack.c.bf16 %v301, %v300
    %v321 = vpack.c.bf16 %v303, %v302
    %v322 = vpack.c.bf16 %v305, %v304
    %v323 = vpack.c.bf16 %v307, %v306
    %v340 = vunpack.c.l.b16 %v308
    %v341 = vunpack.c.h.b16 %v308
    %v342 = vunpack.c.l.b16 %v309
    %v343 = vunpack.c.h.b16 %v309
    %v344 = vunpack.c.l.b16 %v310
    %v345 = vunpack.c.h.b16 %v310
    %v346 = vunpack.c.l.b16 %v311
    %v347 = vunpack.c.h.b16 %v311
    %v348 = vunpack.c.l.b16 %v312
    %v349 = vunpack.c.h.b16 %v312
    %v350 = vunpack.c.l.b16 %v313
    %v351 = vunpack.c.h.b16 %v313
    %v352 = vunpack.c.l.b16 %v314
    %v353 = vunpack.c.h.b16 %v314
    %v354 = vunpack.c.l.b16 %v315
    %v355 = vunpack.c.h.b16 %v315
    %v356 = vunpack.c.l.b16 %v316
    %v357 = vunpack.c.h.b16 %v316
    %v358 = vunpack.c.l.b16 %v317
    %v359 = vunpack.c.h.b16 %v317
    %v360 = vunpack.c.l.b16 %v318
    %v361 = vunpack.c.h.b16 %v318
    %v362 = vunpack.c.l.b16 %v319
    %v363 = vunpack.c.h.b16 %v319
    %v364 = vunpack.c.l.b16 %v320
    %v365 = vunpack.c.h.b16 %v320
    %v366 = vunpack.c.l.b16 %v321
    %v367 = vunpack.c.h.b16 %v321
    %v368 = vunpack.c.l.b16 %v322
    %v369 = vunpack.c.h.b16 %v322
    %v370 = vunpack.c.l.b16 %v323
    %v371 = vunpack.c.h.b16 %v323
    %v372 = vpack.c.b16 %v340, %v340
    %v373 = vpack.c.b16 %v341, %v341
    %v374 = vpack.c.b16 %v342, %v342
    %v375 = vpack.c.b16 %v343, %v343
    %v376 = vpack.c.b16 %v344, %v344
    %v377 = vpack.c.b16 %v345, %v345
    %v378 = vpack.c.b16 %v346, %v346
    %v379 = vpack.c.b16 %v347, %v347
    %v380 = vpack.c.b16 %v348, %v348
    %v381 = vpack.c.b16 %v349, %v349
    %v382 = vpack.c.b16 %v350, %v350
    %v383 = vpack.c.b16 %v351, %v351
    %v384 = vpack.c.b16 %v352, %v352
    %v385 = vpack.c.b16 %v353, %v353
    %v386 = vpack.c.b16 %v354, %v354
    %v387 = vpack.c.b16 %v355, %v355
    %v388 = vpack.c.b16 %v356, %v356
    %v389 = vpack.c.b16 %v357, %v357
    %v390 = vpack.c.b16 %v358, %v358
    %v391 = vpack.c.b16 %v359, %v359
    %v392 = vpack.c.b16 %v360, %v360
    %v393 = vpack.c.b16 %v361, %v361
    %v394 = vpack.c.b16 %v362, %v362
    %v395 = vpack.c.b16 %v363, %v363
    %v396 = vpack.c.b16 %v364, %v364
    %v397 = vpack.c.b16 %v365, %v365
    %v398 = vpack.c.b16 %v366, %v366
    %v399 = vpack.c.b16 %v367, %v367
    %v400 = vpack.c.b16 %v368, %v368
    %v401 = vpack.c.b16 %v369, %v369
    %v402 = vpack.c.b16 %v370, %v370
    %v403 = vpack.c.b16 %v371, %v371
    %436 = vst [vmem:[#allocation2] sm:$0xf] %v372
    %437 = vst [vmem:[#allocation2 + $0x4] sm:$0xf] %v373
    %438 = vst [vmem:[#allocation2 + $0x8] sm:$0xf] %v374
    %439 = vst [vmem:[#allocation2 + $0xc] sm:$0xf] %v375
    %440 = vst [vmem:[#allocation2 + $0x10] sm:$0xf] %v376
    %441 = vst [vmem:[#allocation2 + $0x14] sm:$0xf] %v377
    %442 = vst [vmem:[#allocation2 + $0x18] sm:$0xf] %v378
    %443 = vst [vmem:[#allocation2 + $0x1c] sm:$0xf] %v379
    %444 = vst [vmem:[#allocation2 + $0x20] sm:$0xf] %v380
    %445 = vst [vmem:[#allocation2 + $0x24] sm:$0xf] %v381
    %446 = vst [vmem:[#allocation2 + $0x28] sm:$0xf] %v382
    %447 = vst [vmem:[#allocation2 + $0x2c] sm:$0xf] %v383
    %448 = vst [vmem:[#allocation2 + $0x30] sm:$0xf] %v384
    %449 = vst [vmem:[#allocation2 + $0x34] sm:$0xf] %v385
    %450 = vst [vmem:[#allocation2 + $0x38] sm:$0xf] %v386
    %451 = vst [vmem:[#allocation2 + $0x3c] sm:$0xf] %v387
    %452 = vst [vmem:[#allocation2 + $0x40] sm:$0xf] %v388
    %453 = vst [vmem:[#allocation2 + $0x44] sm:$0xf] %v389
    %454 = vst [vmem:[#allocation2 + $0x48] sm:$0xf] %v390
    %455 = vst [vmem:[#allocation2 + $0x4c] sm:$0xf] %v391
    %456 = vst [vmem:[#allocation2 + $0x50] sm:$0xf] %v392
    %457 = vst [vmem:[#allocation2 + $0x54] sm:$0xf] %v393
    %458 = vst [vmem:[#allocation2 + $0x58] sm:$0xf] %v394
    %459 = vst [vmem:[#allocation2 + $0x5c] sm:$0xf] %v395
    %460 = vst [vmem:[#allocation2 + $0x60] sm:$0xf] %v396
    %461 = vst [vmem:[#allocation2 + $0x64] sm:$0xf] %v397
    %462 = vst [vmem:[#allocation2 + $0x68] sm:$0xf] %v398
    %463 = vst [vmem:[#allocation2 + $0x6c] sm:$0xf] %v399
    %464 = vst [vmem:[#allocation2 + $0x70] sm:$0xf] %v400
    %465 = vst [vmem:[#allocation2 + $0x74] sm:$0xf] %v401
    %466 = vst [vmem:[#allocation2 + $0x78] sm:$0xf] %v402
    %467 = vst [vmem:[#allocation2 + $0x7c] sm:$0xf] %v403
  $region9: #{_forward_core.2} parent=0 // pred_fallthru
    _
  %v468 = vld [vmem:[%s0] sm:$0xff]
  %v469 = vld [vmem:[%s0 + $0x8] sm:$0xff]
  %v470 = vmul.f32 %v468, 10.0
  %v471 = vmul.f32 %v469, 10.0
  %v472 = vmax.f32 %v470, %v471
  %473 = vmax.xlane.f32.xlu0 %v472
  %v474 = vpop.xlane.xlu0 %473
  %v475 = vsub.f32 %v470, %v474
  %v476 = vsub.f32 %v471, %v474
  %v477 = vmul.f32 %v475, 1.442695
  %v478 = vpow.pop %v477
  %v479 = vmul.f32 %v476, 1.442695
  %v480 = vpow.pop %v479
  %v481 = vpack.c.bf16 %v478, %v478
  %v482 = vpack.c.bf16 %v480, %v480
  %v483 = vld [vmem:[#allocation2] sm:$0xf]
  %v484 = vld [vmem:[#allocation2 + $0x4] sm:$0xf]
  %v485 = vld [vmem:[#allocation2 + $0x8] sm:$0xf]
  %v486 = vld [vmem:[#allocation2 + $0xc] sm:$0xf]
  %v487 = vld [vmem:[#allocation2 + $0x10] sm:$0xf]
  %v488 = vld [vmem:[#allocation2 + $0x14] sm:$0xf]
  %v489 = vld [vmem:[#allocation2 + $0x18] sm:$0xf]
  %v490 = vld [vmem:[#allocation2 + $0x1c] sm:$0xf]
  %v491 = vld [vmem:[#allocation2 + $0x20] sm:$0xf]
  %v492 = vld [vmem:[#allocation2 + $0x24] sm:$0xf]
  %v493 = vld [vmem:[#allocation2 + $0x28] sm:$0xf]
  %v494 = vld [vmem:[#allocation2 + $0x2c] sm:$0xf]
  %v495 = vld [vmem:[#allocation2 + $0x30] sm:$0xf]
  %v496 = vld [vmem:[#allocation2 + $0x34] sm:$0xf]
  %v497 = vld [vmem:[#allocation2 + $0x38] sm:$0xf]
  %v498 = vld [vmem:[#allocation2 + $0x3c] sm:$0xf]
  %v499 = vld [vmem:[#allocation2 + $0x40] sm:$0xf]
  %v500 = vld [vmem:[#allocation2 + $0x44] sm:$0xf]
  %v501 = vld [vmem:[#allocation2 + $0x48] sm:$0xf]
  %v502 = vld [vmem:[#allocation2 + $0x4c] sm:$0xf]
  %v503 = vld [vmem:[#allocation2 + $0x50] sm:$0xf]
  %v504 = vld [vmem:[#allocation2 + $0x54] sm:$0xf]
  %v505 = vld [vmem:[#allocation2 + $0x58] sm:$0xf]
  %v506 = vld [vmem:[#allocation2 + $0x5c] sm:$0xf]
  %v507 = vld [vmem:[#allocation2 + $0x60] sm:$0xf]
  %v508 = vld [vmem:[#allocation2 + $0x64] sm:$0xf]
  %v509 = vld [vmem:[#allocation2 + $0x68] sm:$0xf]
  %v510 = vld [vmem:[#allocation2 + $0x6c] sm:$0xf]
  %v511 = vld [vmem:[#allocation2 + $0x70] sm:$0xf]
  %v512 = vld [vmem:[#allocation2 + $0x74] sm:$0xf]
  %v513 = vld [vmem:[#allocation2 + $0x78] sm:$0xf]
  %v514 = vld [vmem:[#allocation2 + $0x7c] sm:$0xf]
  %v547 = vunpack.c.l.b16 %v483
  %v548 = vunpack.c.l.b16 %v484
  %v549 = vunpack.c.l.b16 %v485
  %v550 = vunpack.c.l.b16 %v486
  %v551 = vunpack.c.l.b16 %v487
  %v552 = vunpack.c.l.b16 %v488
  %v553 = vunpack.c.l.b16 %v489
  %v554 = vunpack.c.l.b16 %v490
  %v555 = vunpack.c.l.b16 %v491
  %v556 = vunpack.c.l.b16 %v492
  %v557 = vunpack.c.l.b16 %v493
  %v558 = vunpack.c.l.b16 %v494
  %v559 = vunpack.c.l.b16 %v495
  %v560 = vunpack.c.l.b16 %v496
  %v561 = vunpack.c.l.b16 %v497
  %v562 = vunpack.c.l.b16 %v498
  %v563 = vunpack.c.l.b16 %v499
  %v564 = vunpack.c.l.b16 %v500
  %v565 = vunpack.c.l.b16 %v501
  %v566 = vunpack.c.l.b16 %v502
  %v567 = vunpack.c.l.b16 %v503
  %v568 = vunpack.c.l.b16 %v504
  %v569 = vunpack.c.l.b16 %v505
  %v570 = vunpack.c.l.b16 %v506
  %v571 = vunpack.c.l.b16 %v507
  %v572 = vunpack.c.l.b16 %v508
  %v573 = vunpack.c.l.b16 %v509
  %v574 = vunpack.c.l.b16 %v510
  %v575 = vunpack.c.l.b16 %v511
  %v576 = vunpack.c.l.b16 %v512
  %v577 = vunpack.c.l.b16 %v513
  %v578 = vunpack.c.l.b16 %v514
  %v579 = vpack.c.b16 %v548, %v547
  %v580 = vpack.c.b16 %v550, %v549
  %v581 = vpack.c.b16 %v552, %v551
  %v582 = vpack.c.b16 %v554, %v553
  %v583 = vpack.c.b16 %v556, %v555
  %v584 = vpack.c.b16 %v558, %v557
  %v585 = vpack.c.b16 %v560, %v559
  %v586 = vpack.c.b16 %v562, %v561
  %v587 = vpack.c.b16 %v564, %v563
  %v588 = vpack.c.b16 %v566, %v565
  %v589 = vpack.c.b16 %v568, %v567
  %v590 = vpack.c.b16 %v570, %v569
  %v591 = vpack.c.b16 %v572, %v571
  %v592 = vpack.c.b16 %v574, %v573
  %v593 = vpack.c.b16 %v576, %v575
  %v594 = vpack.c.b16 %v578, %v577
  %611 = vmatprep.subr.bf16.mxu0 0
  %612 = vmatpush1.bf16.msra.mxu0 %v586
  %613 = vmatprep.subr.bf16.mxu0 0
  %614 = vmatpush1.bf16.msra.mxu0 %v585
  %615 = vmatprep.subr.bf16.mxu0 0
  %616 = vmatpush1.bf16.msra.mxu0 %v584
  %617 = vmatprep.subr.bf16.mxu0 0
  %618 = vmatpush1.bf16.msra.mxu0 %v583
  %619 = vmatprep.subr.bf16.mxu0 0
  %620 = vmatpush1.bf16.msra.mxu0 %v582
  %621 = vmatprep.subr.bf16.mxu0 0
  %622 = vmatpush1.bf16.msra.mxu0 %v581
  %623 = vmatprep.subr.bf16.mxu0 0
  %624 = vmatpush1.bf16.msra.mxu0 %v580
  %625 = vmatprep.subr.bf16.mxu0 0
  %626 = vmatpush1.bf16.msra.mxu0 %v579
  %627 = vmatprep.subr.bf16.mxu0 0
  %628 = vmatpush2.bf16.msra.mxu0 %v594
  %629 = vmatprep.subr.bf16.mxu0 0
  %630 = vmatpush2.bf16.msra.mxu0 %v593
  %631 = vmatprep.subr.bf16.mxu0 0
  %632 = vmatpush2.bf16.msra.mxu0 %v592
  %633 = vmatprep.subr.bf16.mxu0 0
  %634 = vmatpush2.bf16.msra.mxu0 %v591
  %635 = vmatprep.subr.bf16.mxu0 0
  %636 = vmatpush2.bf16.msra.mxu0 %v590
  %637 = vmatprep.subr.bf16.mxu0 0
  %638 = vmatpush2.bf16.msra.mxu0 %v589
  %639 = vmatprep.subr.bf16.mxu0 0
  %640 = vmatpush2.bf16.msra.mxu0 %v588
  %641 = vmatprep.subr.bf16.mxu0 0
  %642 = vmatpush2.bf16.msra.mxu0 %v587
  %643 = vmatprep.mubr.bf16.mxu0 %v482
  %644 = vmatmul.mubr.bf16.gmra.mxu0 %v481
  %v645 = vpop.f32.mrf.mxu0
  %v646 = vadd.f32 0.0, %v645
  %v647 = vpop.f32.mrf.mxu0
  %v648 = vpop.f32.mrf.mxu0
  %v649 = vpop.f32.mrf.mxu0
  %650 = vdwg.mxu0
  %652 = vset.pattern.permute.xlu0 2
  %653 = vperm.xlu0 %652, %v646
  %v654 = vpop.permute.xlu0 %653
  %v656 = vrcp.pop %v654
  %v657 = vmul.f32 %v646, %v656
  %658 = vst [vmem:[%s1] sm:$0xff] %v657
  // Predicated region
  $region10: #{_forward_core.2} parent=0 // pred_check
    _
  $region11: #{_forward_core.2} parent=0 // pred_check_branch
    %660 = sbr.rel (0) target = $region13
  $region12: #{_forward_core.2} parent=0 // pred_region
    _
  $region13: #{_forward_core.2} parent=0 // pred_fallthru
    _
  // Predicated region
  $region14: #{_forward_core.2} parent=0 // pred_check
    _
  $region15: #{_forward_core.2} parent=0 // pred_check_branch
    %662 = sbr.rel (0) target = $region17
  $region16: #{_forward_core.2} parent=0 // pred_region
    _
  $region17: #{_forward_core.2} parent=0 // pred_fallthru
    _

</llo_original>
